<compile_context>
chip_gen: v6e
topology: v6e:2x2x1
jax: 0.10.0
libtpu: 0.0.40
codegen_flags: <defaults>
</compile_context>

<pallas_src>
import functools

import jax
import jax.numpy as jnp
import numpy as np
from jax.experimental import pallas as pl
from jax.experimental.pallas import tpu as pltpu


def _pick_bt(B, NM, D, num_negs):
    """Batch elements per grid step + explicit scoped-VMEM limit (bytes)."""
    # f32 bytes per batch element resident in VMEM:
    #   self + cross tiles, gathered neg self/cross tiles, neg-valid, mask
    in_bytes = 4 * NM * (2 * D + 2 * num_negs * D + num_negs + 1)
    per_b = 2 * in_bytes + 4 * NM * (num_negs + 8)   # x2 double-buffer + temps
    try:
        vmem_cap = int(pltpu.get_tpu_info().vmem_capacity_bytes)
    except Exception:                                 # pragma: no cover
        vmem_cap = 64 * 1024 * 1024                   # v7x per-TC floor
    budget = min(vmem_cap // 4, 12 * 1024 * 1024)
    bt = max(1, min(B, budget // max(per_b, 1)))
    if B > 1:
        # keep >= 2 grid steps so both v7x TensorCores get work
        bt = min(bt, (B + 1) // 2)
    vmem_limit = max(8 << 20, min(4 * per_b * bt, 32 << 20))
    vmem_limit = int(min(vmem_limit, max(vmem_cap // 2, 8 << 20)))
    return bt, vmem_limit


# ---------------------------------------------------------------------------
# Fused kernel: positive sim + negative dot products + label-smoothed CE,
# sim and hinge terms, masked partial sums.  One grid step handles Bt batch
# elements and emits a (1, 4, NM) block of partial sums.
# ---------------------------------------------------------------------------
def _ce_style_kernel(s_ref, c_ref, ns_ref, nc_ref, nv_ref, mk_ref, out_ref, *,
                     inv_temp, smoothing, num_negs):
    s = s_ref[...].astype(jnp.float32)                 # (Bt, NM, D)
    c = c_ref[...].astype(jnp.float32)                 # (Bt, NM, D)
    pos = jnp.sum(s * c, axis=-1)                      # (Bt, NM) raw positive
    numer = pos * inv_temp

    # negatives: direct dot products of pre-gathered rows (no NM x NM matmul)
    m = numer
    neg_sum = jnp.zeros_like(numer)
    negs = []
    for j in range(num_negs):
        nsj = ns_ref[:, j, :, :].astype(jnp.float32)   # (Bt, NM, D)
        ncj = nc_ref[:, j, :, :].astype(jnp.float32)   # (Bt, NM, D)
        nj = jnp.sum(nsj * ncj, axis=-1) * inv_temp * nv_ref[:, j, :]
        negs.append(nj)                                # (Bt, NM)
        m = jnp.maximum(m, nj)
        neg_sum = neg_sum + nj

    # log-softmax normalizer over the K = 1 + num_negs logits
    se = jnp.exp(numer - m)
    for j in range(num_negs):
        se = se + jnp.exp(negs[j] - m)
    log_z = jnp.log(se) + m

    # label-smoothed CE in closed form.  NOTE: torch's true_dist sums to
    # 1 + smoothing/(num_negs-1) (fill-then-overwrite pattern), not 1.
    if num_negs == 1:
        chunk_loss = log_z - numer
    else:
        off = smoothing / (num_negs - 1)
        td_sum = (1.0 - smoothing) + num_negs * off
        chunk_loss = td_sum * log_z - (1.0 - smoothing) * numer - off * neg_sum

    sim_term = 1.0 - jnp.clip(pos, -1.0, 1.0)
    hinge_term = jnp.maximum(-numer, 0.0)              # == -clamp(numer, max=0)
    mask = mk_ref[:, 0, :]                             # (Bt, NM) 1.0 = not padded

    # single fused store of the per-step partials (4, NM)
    out_ref[0] = jnp.concatenate(
        [jnp.sum(chunk_loss * mask, axis=0, keepdims=True),
         jnp.sum(sim_term * mask, axis=0, keepdims=True),
         jnp.sum(hinge_term * mask, axis=0, keepdims=True),
         jnp.sum(mask, axis=0, keepdims=True)], axis=0)


# ---------------------------------------------------------------------------
# Wrapper: mirrors CE_style.forward
# ---------------------------------------------------------------------------
def ce_style_forward(self_attd_chunk, cross_attd_chunk, padding_mask,
                     valid_negs_mask, sampled_neg_inds,
                     smoothing=0.1, temperature=1.0):
    B, N, M, D = self_attd_chunk.shape
    NM = N * M
    P = B * NM
    num_negs = sampled_neg_inds.shape[0] // P
    inv_temp = 1.0 / temperature

    s_unf = self_attd_chunk.reshape(B, NM, D)
    c_unf = cross_attd_chunk.reshape(B, NM, D)

    # Gather the sampled rows in the wrapper.  The flat gather order is
    # reinterpreted exactly like torch's `.view(B, N, M, num_negs)`, so this is
    # faithful for ANY layout of sampled_neg_inds (no row-major assumption).
    inds = sampled_neg_inds.astype(jnp.int32)
    b_ix = inds[:, 0].reshape(B, NM, num_negs).transpose(0, 2, 1)  # (B,nn,NM)
    r_ix = inds[:, 1].reshape(B, NM, num_negs).transpose(0, 2, 1)
    c_ix = inds[:, 2].reshape(B, NM, num_negs).transpose(0, 2, 1)
    neg_s = s_unf[b_ix, r_ix]                                      # (B,nn,NM,D)
    neg_c = c_unf[b_ix, c_ix]                                      # (B,nn,NM,D)
    neg_v = valid_negs_mask[b_ix, r_ix, c_ix].astype(jnp.float32)  # (B,nn,NM)

    not_padded = jnp.logical_not(padding_mask[:, :, :, 0]).astype(jnp.float32)
    not_padded = not_padded.reshape(B, 1, NM)

    bt, vmem_limit = _pick_bt(B, NM, D, num_negs)
    B_pad = ((B + bt - 1) // bt) * bt
    if B_pad != B:
        pw = B_pad - B       # zero-padded batches have mask 0 -> contribute 0
        s_unf = jnp.pad(s_unf, ((0, pw), (0, 0), (0, 0)))
        c_unf = jnp.pad(c_unf, ((0, pw), (0, 0), (0, 0)))
        neg_s = jnp.pad(neg_s, ((0, pw), (0, 0), (0, 0), (0, 0)))
        neg_c = jnp.pad(neg_c, ((0, pw), (0, 0), (0, 0), (0, 0)))
        neg_v = jnp.pad(neg_v, ((0, pw), (0, 0), (0, 0)))
        not_padded = jnp.pad(not_padded, ((0, pw), (0, 0), (0, 0)))

    grid = B_pad // bt
    partials = pl.pallas_call(
        functools.partial(_ce_style_kernel, inv_temp=inv_temp,
                          smoothing=smoothing, num_negs=num_negs),
        out_shape=jax.ShapeDtypeStruct((grid, 4, NM), jnp.float32),
        grid=(grid,),
        in_specs=[
            pl.BlockSpec((bt, NM, D), lambda b: (b, 0, 0)),
            pl.BlockSpec((bt, NM, D), lambda b: (b, 0, 0)),
            pl.BlockSpec((bt, num_negs, NM, D), lambda b: (b, 0, 0, 0)),
            pl.BlockSpec((bt, num_negs, NM, D), lambda b: (b, 0, 0, 0)),
            pl.BlockSpec((bt, num_negs, NM), lambda b: (b, 0, 0)),
            pl.BlockSpec((bt, 1, NM), lambda b: (b, 0, 0)),
        ],
        out_specs=pl.BlockSpec((1, 4, NM), lambda b: (b, 0, 0)),
        compiler_params=pltpu.CompilerParams(
            dimension_semantics=("parallel",),
            vmem_limit_bytes=vmem_limit),
    )(s_unf, c_unf, neg_s, neg_c, neg_v, not_padded)

    sums = jnp.sum(partials, axis=(0, 2))   # [ce_sum, sim_sum, hinge_sum, count]
    count = sums[3]                          # NOTE: NaN if all padded (matches torch)
    return sums[0] / count, sums[1] / count, sums[2] / count


# ---------------------------------------------------------------------------
# Pure-JAX reference (mirrors the PyTorch code) for a sanity check
# ---------------------------------------------------------------------------
def ce_style_reference(self_attd, cross_attd, padding_mask, valid_negs_mask,
                       sampled_neg_inds, smoothing=0.1, temperature=1.0):
    B, N, M, D = self_attd.shape
    num = (self_attd * cross_attd).sum(-1)
    numerator = num / temperature
    padded_row = padding_mask[:, :, :, 0]
    s = self_attd.reshape(B, N * M, D)
    c = cross_attd.reshape(B, N * M, D)
    sim = jnp.einsum("bpd,bqd->bpq", s, c,
                     precision=jax.lax.Precision.HIGHEST) / temperature
    sim = jnp.where(valid_negs_mask, sim, 0.0)
    g = sim[sampled_neg_inds[:, 0], sampled_neg_inds[:, 1],
            sampled_neg_inds[:, 2]].reshape(B, N, M, -1)
    num_negs = g.shape[-1]
    pred = jnp.concatenate([numerator[..., None], g], -1)
    log_prob = jax.nn.log_softmax(pred, -1)
    if num_negs == 1:
        true_dist = jnp.zeros_like(log_prob).at[..., 0].set(1.0)
    else:
        true_dist = jnp.full_like(log_prob, smoothing / (num_negs - 1)
                                  ).at[..., 0].set(1.0 - smoothing)
    chunk = jnp.sum(-true_dist * log_prob, -1)
    not_p = ~padded_row
    cnt = not_p.sum()
    ce = jnp.sum(jnp.where(not_p, chunk, 0.0)) / cnt
    sim_l = jnp.sum(jnp.where(not_p, 1.0 - jnp.clip(num, -1.0, 1.0), 0.0)) / cnt
    hinge = jnp.sum(jnp.where(not_p, jnp.maximum(-numerator, 0.0), 0.0)) / cnt
    return ce, sim_l, hinge


if __name__ == "__main__":
    B, N, M, D, num_negs = 2, 2, 8, 32, 4
    NM = N * M
    smoothing, temperature = 0.1, 1.0

    key = jax.random.PRNGKey(0)
    k1, k2 = jax.random.split(key)
    self_attd = jax.random.normal(k1, (B, N, M, D), jnp.float32)
    cross_attd = jax.random.normal(k2, (B, N, M, D), jnp.float32)
    # unit-norm chunks (cosine-like similarities)
    self_attd = self_attd / jnp.linalg.norm(self_attd, axis=-1, keepdims=True)
    cross_attd = cross_attd / jnp.linalg.norm(cross_attd, axis=-1, keepdims=True)

    # padding: last chunk of every group of batch 1 is padded
    padded = jnp.zeros((B, N, M), bool).at[1, :, M - 1].set(True)
    padding_mask = jnp.broadcast_to(padded[..., None], (B, N, M, M))

    # valid negatives: same group, not self, target chunk not padded
    grp = jnp.arange(NM) // M
    same_grp = grp[:, None] == grp[None, :]
    not_self = ~jnp.eye(NM, dtype=bool)
    padded_flat = padded.reshape(B, NM)
    valid_negs_mask = same_grp[None] & not_self[None] & ~padded_flat[:, None, :]

    # deterministic sampled negative indices, row-major over (b, n, m, j)
    b_idx = jnp.arange(B)[:, None, None, None]
    n_idx = jnp.arange(N)[None, :, None, None]
    m_idx = jnp.arange(M)[None, None, :, None]
    j_idx = jnp.arange(num_negs)[None, None, None, :]
    row = jnp.broadcast_to(n_idx * M + m_idx, (B, N, M, num_negs))
    off = 1 + (m_idx * 3 + j_idx) % (M - 1)          # avoids self within group
    col = jnp.broadcast_to(n_idx * M + (m_idx + off) % M, (B, N, M, num_negs))
    b_full = jnp.broadcast_to(b_idx, (B, N, M, num_negs))
    sampled_neg_inds = jnp.stack(
        [b_full.reshape(-1), row.reshape(-1), col.reshape(-1)],
        axis=1).astype(jnp.int32)

    out = ce_style_forward(self_attd, cross_attd, padding_mask,
                           valid_negs_mask, sampled_neg_inds,
                           smoothing=smoothing, temperature=temperature)
    out = jax.block_until_ready(out)

    ref = ce_style_reference(self_attd, cross_attd, padding_mask,
                             valid_negs_mask, sampled_neg_inds,
                             smoothing=smoothing, temperature=temperature)
    np.testing.assert_allclose(np.array(out), np.array(ref),
                               rtol=1e-3, atol=1e-4)

    print("KERNEL_OK")
</pallas_src>

<mosaic_0001>
module attributes {stable_mosaic.version = 11 : i64} {
  func.func @_ce_style_kernel(%arg0: i32, %arg1: memref<1x16x32xf32, #tpu.memory_space<vmem>>, %arg2: memref<1x16x32xf32, #tpu.memory_space<vmem>>, %arg3: memref<1x4x16x32xf32, #tpu.memory_space<vmem>>, %arg4: memref<1x4x16x32xf32, #tpu.memory_space<vmem>>, %arg5: memref<1x4x16xf32, #tpu.memory_space<vmem>>, %arg6: memref<1x1x16xf32, #tpu.memory_space<vmem>>, %arg7: memref<1x4x16xf32, #tpu.memory_space<vmem>>) attributes {dimension_semantics = [#tpu.dimension_semantics<parallel>], iteration_bounds = array<i64: 2>, scalar_prefetch = 0 : i64, scratch_operands = 0 : i64, tpu.core_type = #tpu.core_type<tc>, window_params = [{transform_indices = @transform_0, window_bounds = array<i64: 1, 16, 32>}, {transform_indices = @transform_1, window_bounds = array<i64: 1, 16, 32>}, {transform_indices = @transform_2, window_bounds = array<i64: 1, 4, 16, 32>}, {transform_indices = @transform_3, window_bounds = array<i64: 1, 4, 16, 32>}, {transform_indices = @transform_4, window_bounds = array<i64: 1, 4, 16>}, {transform_indices = @transform_5, window_bounds = array<i64: 1, 1, 16>}, {transform_indices = @transform_6, window_bounds = array<i64: 1, 4, 16>}]} {
    %c0 = arith.constant 0 : index
    %c0_0 = arith.constant 0 : index
    %c0_1 = arith.constant 0 : index
    %0 = vector.load %arg1[%c0, %c0_0, %c0_1] : memref<1x16x32xf32, #tpu.memory_space<vmem>>, vector<1x16x32xf32>
    %c0_2 = arith.constant 0 : index
    %c0_3 = arith.constant 0 : index
    %c0_4 = arith.constant 0 : index
    %1 = vector.load %arg2[%c0_2, %c0_3, %c0_4] : memref<1x16x32xf32, #tpu.memory_space<vmem>>, vector<1x16x32xf32>
    %2 = arith.mulf %0, %1 : vector<1x16x32xf32>
    %cst = arith.constant dense<0.000000e+00> : vector<1x16xf32>
    %3 = vector.multi_reduction <add>, %2, %cst [2] : vector<1x16x32xf32> to vector<1x16xf32>
    %cst_5 = arith.constant 1.000000e+00 : f32
    %4 = vector.broadcast %cst_5 : f32 to vector<1x16xf32>
    %5 = arith.mulf %3, %4 : vector<1x16xf32>
    %cst_6 = arith.constant 0.000000e+00 : f32
    %6 = vector.broadcast %cst_6 : f32 to vector<1x16xf32>
    %c0_7 = arith.constant 0 : index
    %c0_8 = arith.constant 0 : index
    %c0_9 = arith.constant 0 : index
    %c0_10 = arith.constant 0 : index
    %7 = vector.load %arg3[%c0_7, %c0_8, %c0_9, %c0_10] : memref<1x4x16x32xf32, #tpu.memory_space<vmem>>, vector<1x1x16x32xf32>
    %8 = vector.shape_cast %7 : vector<1x1x16x32xf32> to vector<1x16x32xf32>
    %c0_11 = arith.constant 0 : index
    %c0_12 = arith.constant 0 : index
    %c0_13 = arith.constant 0 : index
    %c0_14 = arith.constant 0 : index
    %9 = vector.load %arg4[%c0_11, %c0_12, %c0_13, %c0_14] : memref<1x4x16x32xf32, #tpu.memory_space<vmem>>, vector<1x1x16x32xf32>
    %10 = vector.shape_cast %9 : vector<1x1x16x32xf32> to vector<1x16x32xf32>
    %11 = arith.mulf %8, %10 : vector<1x16x32xf32>
    %cst_15 = arith.constant dense<0.000000e+00> : vector<1x16xf32>
    %12 = vector.multi_reduction <add>, %11, %cst_15 [2] : vector<1x16x32xf32> to vector<1x16xf32>
    %cst_16 = arith.constant 1.000000e+00 : f32
    %13 = vector.broadcast %cst_16 : f32 to vector<1x16xf32>
    %14 = arith.mulf %12, %13 : vector<1x16xf32>
    %c0_17 = arith.constant 0 : index
    %c0_18 = arith.constant 0 : index
    %c0_19 = arith.constant 0 : index
    %15 = vector.load %arg5[%c0_17, %c0_18, %c0_19] : memref<1x4x16xf32, #tpu.memory_space<vmem>>, vector<1x1x16xf32>
    %16 = vector.shape_cast %15 : vector<1x1x16xf32> to vector<1x16xf32>
    %17 = arith.mulf %14, %16 : vector<1x16xf32>
    %18 = arith.maximumf %5, %17 : vector<1x16xf32>
    %19 = arith.addf %6, %17 : vector<1x16xf32>
    %c0_20 = arith.constant 0 : index
    %c1 = arith.constant 1 : index
    %c0_21 = arith.constant 0 : index
    %c0_22 = arith.constant 0 : index
    %20 = vector.load %arg3[%c0_20, %c1, %c0_21, %c0_22] : memref<1x4x16x32xf32, #tpu.memory_space<vmem>>, vector<1x1x16x32xf32>
    %21 = vector.shape_cast %20 : vector<1x1x16x32xf32> to vector<1x16x32xf32>
    %c0_23 = arith.constant 0 : index
    %c1_24 = arith.constant 1 : index
    %c0_25 = arith.constant 0 : index
    %c0_26 = arith.constant 0 : index
    %22 = vector.load %arg4[%c0_23, %c1_24, %c0_25, %c0_26] : memref<1x4x16x32xf32, #tpu.memory_space<vmem>>, vector<1x1x16x32xf32>
    %23 = vector.shape_cast %22 : vector<1x1x16x32xf32> to vector<1x16x32xf32>
    %24 = arith.mulf %21, %23 : vector<1x16x32xf32>
    %cst_27 = arith.constant dense<0.000000e+00> : vector<1x16xf32>
    %25 = vector.multi_reduction <add>, %24, %cst_27 [2] : vector<1x16x32xf32> to vector<1x16xf32>
    %cst_28 = arith.constant 1.000000e+00 : f32
    %26 = vector.broadcast %cst_28 : f32 to vector<1x16xf32>
    %27 = arith.mulf %25, %26 : vector<1x16xf32>
    %c0_29 = arith.constant 0 : index
    %c1_30 = arith.constant 1 : index
    %c0_31 = arith.constant 0 : index
    %28 = vector.load %arg5[%c0_29, %c1_30, %c0_31] : memref<1x4x16xf32, #tpu.memory_space<vmem>>, vector<1x1x16xf32>
    %29 = vector.shape_cast %28 : vector<1x1x16xf32> to vector<1x16xf32>
    %30 = arith.mulf %27, %29 : vector<1x16xf32>
    %31 = arith.maximumf %18, %30 : vector<1x16xf32>
    %32 = arith.addf %19, %30 : vector<1x16xf32>
    %c0_32 = arith.constant 0 : index
    %c2 = arith.constant 2 : index
    %c0_33 = arith.constant 0 : index
    %c0_34 = arith.constant 0 : index
    %33 = vector.load %arg3[%c0_32, %c2, %c0_33, %c0_34] : memref<1x4x16x32xf32, #tpu.memory_space<vmem>>, vector<1x1x16x32xf32>
    %34 = vector.shape_cast %33 : vector<1x1x16x32xf32> to vector<1x16x32xf32>
    %c0_35 = arith.constant 0 : index
    %c2_36 = arith.constant 2 : index
    %c0_37 = arith.constant 0 : index
    %c0_38 = arith.constant 0 : index
    %35 = vector.load %arg4[%c0_35, %c2_36, %c0_37, %c0_38] : memref<1x4x16x32xf32, #tpu.memory_space<vmem>>, vector<1x1x16x32xf32>
    %36 = vector.shape_cast %35 : vector<1x1x16x32xf32> to vector<1x16x32xf32>
    %37 = arith.mulf %34, %36 : vector<1x16x32xf32>
    %cst_39 = arith.constant dense<0.000000e+00> : vector<1x16xf32>
    %38 = vector.multi_reduction <add>, %37, %cst_39 [2] : vector<1x16x32xf32> to vector<1x16xf32>
    %cst_40 = arith.constant 1.000000e+00 : f32
    %39 = vector.broadcast %cst_40 : f32 to vector<1x16xf32>
    %40 = arith.mulf %38, %39 : vector<1x16xf32>
    %c0_41 = arith.constant 0 : index
    %c2_42 = arith.constant 2 : index
    %c0_43 = arith.constant 0 : index
    %41 = vector.load %arg5[%c0_41, %c2_42, %c0_43] : memref<1x4x16xf32, #tpu.memory_space<vmem>>, vector<1x1x16xf32>
    %42 = vector.shape_cast %41 : vector<1x1x16xf32> to vector<1x16xf32>
    %43 = arith.mulf %40, %42 : vector<1x16xf32>
    %44 = arith.maximumf %31, %43 : vector<1x16xf32>
    %45 = arith.addf %32, %43 : vector<1x16xf32>
    %c0_44 = arith.constant 0 : index
    %c3 = arith.constant 3 : index
    %c0_45 = arith.constant 0 : index
    %c0_46 = arith.constant 0 : index
    %46 = vector.load %arg3[%c0_44, %c3, %c0_45, %c0_46] : memref<1x4x16x32xf32, #tpu.memory_space<vmem>>, vector<1x1x16x32xf32>
    %47 = vector.shape_cast %46 : vector<1x1x16x32xf32> to vector<1x16x32xf32>
    %c0_47 = arith.constant 0 : index
    %c3_48 = arith.constant 3 : index
    %c0_49 = arith.constant 0 : index
    %c0_50 = arith.constant 0 : index
    %48 = vector.load %arg4[%c0_47, %c3_48, %c0_49, %c0_50] : memref<1x4x16x32xf32, #tpu.memory_space<vmem>>, vector<1x1x16x32xf32>
    %49 = vector.shape_cast %48 : vector<1x1x16x32xf32> to vector<1x16x32xf32>
    %50 = arith.mulf %47, %49 : vector<1x16x32xf32>
    %cst_51 = arith.constant dense<0.000000e+00> : vector<1x16xf32>
    %51 = vector.multi_reduction <add>, %50, %cst_51 [2] : vector<1x16x32xf32> to vector<1x16xf32>
    %cst_52 = arith.constant 1.000000e+00 : f32
    %52 = vector.broadcast %cst_52 : f32 to vector<1x16xf32>
    %53 = arith.mulf %51, %52 : vector<1x16xf32>
    %c0_53 = arith.constant 0 : index
    %c3_54 = arith.constant 3 : index
    %c0_55 = arith.constant 0 : index
    %54 = vector.load %arg5[%c0_53, %c3_54, %c0_55] : memref<1x4x16xf32, #tpu.memory_space<vmem>>, vector<1x1x16xf32>
    %55 = vector.shape_cast %54 : vector<1x1x16xf32> to vector<1x16xf32>
    %56 = arith.mulf %53, %55 : vector<1x16xf32>
    %57 = arith.maximumf %44, %56 : vector<1x16xf32>
    %58 = arith.addf %45, %56 : vector<1x16xf32>
    %59 = arith.subf %5, %57 : vector<1x16xf32>
    %60 = math.exp %59 : vector<1x16xf32>
    %61 = arith.subf %17, %57 : vector<1x16xf32>
    %62 = math.exp %61 : vector<1x16xf32>
    %63 = arith.addf %60, %62 : vector<1x16xf32>
    %64 = arith.subf %30, %57 : vector<1x16xf32>
    %65 = math.exp %64 : vector<1x16xf32>
    %66 = arith.addf %63, %65 : vector<1x16xf32>
    %67 = arith.subf %43, %57 : vector<1x16xf32>
    %68 = math.exp %67 : vector<1x16xf32>
    %69 = arith.addf %66, %68 : vector<1x16xf32>
    %70 = arith.subf %56, %57 : vector<1x16xf32>
    %71 = math.exp %70 : vector<1x16xf32>
    %72 = arith.addf %69, %71 : vector<1x16xf32>
    %73 = math.log %72 : vector<1x16xf32>
    %74 = arith.addf %73, %57 : vector<1x16xf32>
    %cst_56 = arith.constant 1.0333333 : f32
    %75 = vector.broadcast %cst_56 : f32 to vector<1x16xf32>
    %76 = arith.mulf %75, %74 : vector<1x16xf32>
    %cst_57 = arith.constant 0.899999976 : f32
    %77 = vector.broadcast %cst_57 : f32 to vector<1x16xf32>
    %78 = arith.mulf %77, %5 : vector<1x16xf32>
    %79 = arith.subf %76, %78 : vector<1x16xf32>
    %cst_58 = arith.constant 0.0333333351 : f32
    %80 = vector.broadcast %cst_58 : f32 to vector<1x16xf32>
    %81 = arith.mulf %80, %58 : vector<1x16xf32>
    %82 = arith.subf %79, %81 : vector<1x16xf32>
    %cst_59 = arith.constant -1.000000e+00 : f32
    %cst_60 = arith.constant 1.000000e+00 : f32
    %83 = vector.broadcast %cst_59 : f32 to vector<1x16xf32>
    %84 = arith.maximumf %83, %3 : vector<1x16xf32>
    %85 = vector.broadcast %cst_60 : f32 to vector<1x16xf32>
    %86 = arith.minimumf %85, %84 : vector<1x16xf32>
    %cst_61 = arith.constant 1.000000e+00 : f32
    %87 = vector.broadcast %cst_61 : f32 to vector<1x16xf32>
    %88 = arith.subf %87, %86 : vector<1x16xf32>
    %cst_62 = arith.constant 0.000000e+00 : f32
    %89 = vector.broadcast %cst_62 : f32 to vector<1x16xf32>
    %90 = arith.subf %89, %5 : vector<1x16xf32>
    %cst_63 = arith.constant 0.000000e+00 : f32
    %91 = vector.broadcast %cst_63 : f32 to vector<1x16xf32>
    %92 = arith.maximumf %90, %91 : vector<1x16xf32>
    %c0_64 = arith.constant 0 : index
    %c0_65 = arith.constant 0 : index
    %c0_66 = arith.constant 0 : index
    %93 = vector.load %arg6[%c0_64, %c0_65, %c0_66] : memref<1x1x16xf32, #tpu.memory_space<vmem>>, vector<1x1x16xf32>
    %94 = vector.shape_cast %93 : vector<1x1x16xf32> to vector<1x16xf32>
    %95 = arith.mulf %82, %94 : vector<1x16xf32>
    %cst_67 = arith.constant dense<0.000000e+00> : vector<16xf32>
    %96 = vector.multi_reduction <add>, %95, %cst_67 [0] : vector<1x16xf32> to vector<16xf32>
    %97 = vector.shape_cast %96 : vector<16xf32> to vector<1x16xf32>
    %98 = arith.mulf %88, %94 : vector<1x16xf32>
    %cst_68 = arith.constant dense<0.000000e+00> : vector<16xf32>
    %99 = vector.multi_reduction <add>, %98, %cst_68 [0] : vector<1x16xf32> to vector<16xf32>
    %100 = vector.shape_cast %99 : vector<16xf32> to vector<1x16xf32>
    %101 = arith.mulf %92, %94 : vector<1x16xf32>
    %cst_69 = arith.constant dense<0.000000e+00> : vector<16xf32>
    %102 = vector.multi_reduction <add>, %101, %cst_69 [0] : vector<1x16xf32> to vector<16xf32>
    %103 = vector.shape_cast %102 : vector<16xf32> to vector<1x16xf32>
    %cst_70 = arith.constant dense<0.000000e+00> : vector<16xf32>
    %104 = vector.multi_reduction <add>, %94, %cst_70 [0] : vector<1x16xf32> to vector<16xf32>
    %105 = vector.shape_cast %104 : vector<16xf32> to vector<1x16xf32>
    %106 = tpu.concatenate %97, %100, %103, %105 in 0 : vector<1x16xf32>, vector<1x16xf32>, vector<1x16xf32>, vector<1x16xf32> -> vector<4x16xf32>
    %c0_71 = arith.constant 0 : index
    %c0_72 = arith.constant 0 : index
    %c0_73 = arith.constant 0 : index
    %107 = vector.load %arg7[%c0_71, %c0_72, %c0_73] : memref<1x4x16xf32, #tpu.memory_space<vmem>>, vector<1x4x16xf32>
    %108 = vector.shape_cast %107 : vector<1x4x16xf32> to vector<4x16xf32>
    %109 = vector.shape_cast %106 : vector<4x16xf32> to vector<1x4x16xf32>
    tpu.vector_store %arg7[%c0_71, %c0_72, %c0_73], %109 {strides = array<i32>} : memref<1x4x16xf32, #tpu.memory_space<vmem>>, vector<1x4x16xf32>,
    return
  }
  func.func @transform_0(%arg0: i32) -> (i32, i32, i32) {
    %c0_i32 = arith.constant 0 : i32
    %c0_i32_0 = arith.constant 0 : i32
    %c0_i32_1 = arith.constant 0 : i32
    return %arg0, %c0_i32, %c0_i32_0 : i32, i32, i32
  }
  func.func @transform_1(%arg0: i32) -> (i32, i32, i32) {
    %c0_i32 = arith.constant 0 : i32
    %c0_i32_0 = arith.constant 0 : i32
    %c0_i32_1 = arith.constant 0 : i32
    return %arg0, %c0_i32, %c0_i32_0 : i32, i32, i32
  }
  func.func @transform_2(%arg0: i32) -> (i32, i32, i32, i32) {
    %c0_i32 = arith.constant 0 : i32
    %c0_i32_0 = arith.constant 0 : i32
    %c0_i32_1 = arith.constant 0 : i32
    %c0_i32_2 = arith.constant 0 : i32
    return %arg0, %c0_i32, %c0_i32_0, %c0_i32_1 : i32, i32, i32, i32
  }
  func.func @transform_3(%arg0: i32) -> (i32, i32, i32, i32) {
    %c0_i32 = arith.constant 0 : i32
    %c0_i32_0 = arith.constant 0 : i32
    %c0_i32_1 = arith.constant 0 : i32
    %c0_i32_2 = arith.constant 0 : i32
    return %arg0, %c0_i32, %c0_i32_0, %c0_i32_1 : i32, i32, i32, i32
  }
  func.func @transform_4(%arg0: i32) -> (i32, i32, i32) {
    %c0_i32 = arith.constant 0 : i32
    %c0_i32_0 = arith.constant 0 : i32
    %c0_i32_1 = arith.constant 0 : i32
    return %arg0, %c0_i32, %c0_i32_0 : i32, i32, i32
  }
  func.func @transform_5(%arg0: i32) -> (i32, i32, i32) {
    %c0_i32 = arith.constant 0 : i32
    %c0_i32_0 = arith.constant 0 : i32
    %c0_i32_1 = arith.constant 0 : i32
    return %arg0, %c0_i32, %c0_i32_0 : i32, i32, i32
  }
  func.func @transform_6(%arg0: i32) -> (i32, i32, i32) {
    %c0_i32 = arith.constant 0 : i32
    %c0_i32_0 = arith.constant 0 : i32
    %c0_i32_1 = arith.constant 0 : i32
    return %arg0, %c0_i32, %c0_i32_0 : i32, i32, i32
  }
}

</mosaic_0001>

<llo_original>
// kernel: tpu_custom_call.1
$region0: #{tpu_custom_call.1}
  #allocation0 [shape = 'u32[]', space=smem, size = 0x4, offset = 0x4, fixed_abs, tag = 'smem constant byte address 0x4 - core index']
  #allocation1 [shape = 'u32[144,128]{1,0:T(1,128)}', space=vmem, size = 0x12000, scoped, tag = 'internal scratch']
  %s0 = inlined_call_operand.hbm [shape: f32[2,16,32], index: 0, kind: input, shape index: {}]
  %s1 = inlined_call_operand.hbm [shape: f32[2,16,32], index: 1, kind: input, shape index: {}]
  %s2 = inlined_call_operand.hbm [shape: f32[2,4,16,32], index: 2, kind: input, shape index: {}]
  %s3 = inlined_call_operand.hbm [shape: f32[2,4,16,32], index: 3, kind: input, shape index: {}]
  %s4 = inlined_call_operand.hbm [shape: f32[2,4,16], index: 4, kind: input, shape index: {}]
  %s5 = inlined_call_operand.vmem [shape: f32[2,1,16], index: 5, kind: input, shape index: {}]
  %s6 = inlined_call_operand.hbm [shape: f32[2,4,16], index: 6, kind: output, shape index: {}]
  %s7 = sld [smem:[#allocation0]]
  $region77: #{tpu_custom_call.1} parent=0
    _
  %s9 = ssub.s32 1, %s7
  %s10 = scalar_select 0, %s9, %s7
  $region1: #{tpu_custom_call.1} parent=0
    #allocation2 [shape = 'u8[16384]{0}', space=vmem, size = 0x4000, scoped, tag = 'input window, operand 0']
    #allocation3 [shape = 's32[2]{0}', space=sflag, size = 0x8, scoped, tag = 'scoped memory for tpu_custom_call.1']
    #allocation4 [shape = 's32[2]{0}', space=sflag, size = 0x8, scoped, tag = 'scoped memory for tpu_custom_call.1']
    #allocation5 [shape = 'u8[16384]{0}', space=vmem, size = 0x4000, scoped, tag = 'input window, operand 1']
    #allocation6 [shape = 's32[2]{0}', space=sflag, size = 0x8, scoped, tag = 'scoped memory for tpu_custom_call.1']
    #allocation7 [shape = 'u8[65536]{0}', space=vmem, size = 0x10000, scoped, tag = 'input window, operand 2']
    #allocation8 [shape = 'u8[65536]{0}', space=vmem, size = 0x10000, scoped, tag = 'input window, operand 3']
    #allocation9 [shape = 's32[2]{0}', space=sflag, size = 0x8, scoped, tag = 'scoped memory for tpu_custom_call.1']
    #allocation10 [shape = 'u8[4096]{0}', space=vmem, size = 0x1000, scoped, tag = 'input window, operand 4']
    #allocation11 [shape = 'u8[4096]{0}', space=vmem, size = 0x1000, scoped, tag = 'output window, operand 0']
    %11 = vsyncpa [#allocation3], 0
    %s12 = scalar_lea.sflag [#allocation3], 1
    %13 = vsyncpa %s12, 0
    %14 = vsyncpa [#allocation6], 0
    %s15 = scalar_lea.sflag [#allocation6], 1
    %16 = vsyncpa %s15, 0
    %17 = vsyncpa [#allocation9], 0
    %s18 = scalar_lea.sflag [#allocation9], 1
    %19 = vsyncpa %s18, 0
    %20 = vsyncpa [#allocation4], 0
    %s21 = scalar_lea.sflag [#allocation4], 1
    %22 = vsyncpa %s21, 0
    loop: start=0, step=1, limit=4
    $region2: #{tpu_custom_call.1} parent=1 // loop_pre_header
      _
    $region3: #{tpu_custom_call.1} parent=1 // loop_header
      %s24 = sphi 0, %s28
      %p25 = scmp.ge.s32.totalorder %s24, 4
      %s34 = sphi 0, %s36
      %s37 = sphi 0, %s34
      %s38 = sphi 0, %s37
      %s54 = sphi 0, %s38
      %s60 = sphi 0, %s62
      %s63 = sphi 0, %s60
      %s64 = sphi 0, %s63
      %s80 = sphi 0, %s64
      %s86 = sphi 0, %s88
      %s89 = sphi 0, %s86
      %s90 = sphi 0, %s89
      %s106 = sphi 0, %s90
      %s112 = sphi 0, %s114
      %s115 = sphi 0, %s112
      %s116 = sphi 0, %s115
      %s132 = sphi 0, %s116
      %s138 = sphi 0, %s140
      %s141 = sphi 0, %s138
      %s142 = sphi 0, %s141
      %s158 = sphi 0, %s142
      %s164 = sphi 0, %s166
      %s167 = sphi 0, %s164
      %s168 = sphi 0, %s167
      %s184 = sphi 0, %s168
      %s190 = sphi 0, %s192
      %s193 = sphi 0, %s190
      %s194 = sphi 0, %s193
      %s210 = sphi 0, %s194
    $region4: #{tpu_custom_call.1} parent=1 // loop_header_branch
      %27 = sbr.rel (%p25) target = $region8
    $region5: #{tpu_custom_call.1} parent=1 // loop_body
      %s29 = ssub.s32 %s24, 1
      %s30 = ssub.s32 %s24, 2
      %s31 = sadd.s32 %s24, 1
      %s32 = ssub.s32 %s24, %s31
      %p33 = scmp.eq.s32.totalorder %s32, 0
      %s35 = sadd.s32 %s34, 1
      %s36 = scalar_select %p33, %s34, %s35
      %p39 = pneg %p33
      %p40 = scmp.eq.s32.totalorder %s24, 1
      %p41 = por %p39, %p40
      %p42 = scmp.ne.s32.totalorder %s34, %s37
      %p43 = scmp.eq.s32.totalorder %s24, 0
      %p44 = por %p42, %p43
      %p45 = scmp.ne.s32.totalorder %s34, %s37
      %p46 = scmp.eq.s32.totalorder %s29, 1
      %p47 = por %p45, %p46
      %p48 = scmp.ne.s32.totalorder %s37, %s38
      %p49 = scmp.eq.s32.totalorder %s29, 0
      %p50 = por %p48, %p49
      %p51 = scmp.ne.s32.totalorder %s37, %s38
      %p52 = scmp.eq.s32.totalorder %s30, 1
      %p53 = por %p51, %p52
      %p55 = scmp.ne.s32.totalorder %s38, %s54
      %p56 = scmp.eq.s32.totalorder %s30, 0
      %p57 = por %p55, %p56
      %s58 = ssub.s32 %s24, %s31
      %p59 = scmp.eq.s32.totalorder %s58, 0
      %s61 = sadd.s32 %s60, 1
      %s62 = scalar_select %p59, %s60, %s61
      %p65 = pneg %p59
      %p66 = scmp.eq.s32.totalorder %s24, 1
      %p67 = por %p65, %p66
      %p68 = scmp.ne.s32.totalorder %s60, %s63
      %p69 = scmp.eq.s32.totalorder %s24, 0
      %p70 = por %p68, %p69
      %p71 = scmp.ne.s32.totalorder %s60, %s63
      %p72 = scmp.eq.s32.totalorder %s29, 1
      %p73 = por %p71, %p72
      %p74 = scmp.ne.s32.totalorder %s63, %s64
      %p75 = scmp.eq.s32.totalorder %s29, 0
      %p76 = por %p74, %p75
      %p77 = scmp.ne.s32.totalorder %s63, %s64
      %p78 = scmp.eq.s32.totalorder %s30, 1
      %p79 = por %p77, %p78
      %p81 = scmp.ne.s32.totalorder %s64, %s80
      %p82 = scmp.eq.s32.totalorder %s30, 0
      %p83 = por %p81, %p82
      %s84 = ssub.s32 %s24, %s31
      %p85 = scmp.eq.s32.totalorder %s84, 0
      %s87 = sadd.s32 %s86, 1
      %s88 = scalar_select %p85, %s86, %s87
      %p91 = pneg %p85
      %p92 = scmp.eq.s32.totalorder %s24, 1
      %p93 = por %p91, %p92
      %p94 = scmp.ne.s32.totalorder %s86, %s89
      %p95 = scmp.eq.s32.totalorder %s24, 0
      %p96 = por %p94, %p95
      %p97 = scmp.ne.s32.totalorder %s86, %s89
      %p98 = scmp.eq.s32.totalorder %s29, 1
      %p99 = por %p97, %p98
      %p100 = scmp.ne.s32.totalorder %s89, %s90
      %p101 = scmp.eq.s32.totalorder %s29, 0
      %p102 = por %p100, %p101
      %p103 = scmp.ne.s32.totalorder %s89, %s90
      %p104 = scmp.eq.s32.totalorder %s30, 1
      %p105 = por %p103, %p104
      %p107 = scmp.ne.s32.totalorder %s90, %s106
      %p108 = scmp.eq.s32.totalorder %s30, 0
      %p109 = por %p107, %p108
      %s110 = ssub.s32 %s24, %s31
      %p111 = scmp.eq.s32.totalorder %s110, 0
      %s113 = sadd.s32 %s112, 1
      %s114 = scalar_select %p111, %s112, %s113
      %p117 = pneg %p111
      %p118 = scmp.eq.s32.totalorder %s24, 1
      %p119 = por %p117, %p118
      %p120 = scmp.ne.s32.totalorder %s112, %s115
      %p121 = scmp.eq.s32.totalorder %s24, 0
      %p122 = por %p120, %p121
      %p123 = scmp.ne.s32.totalorder %s112, %s115
      %p124 = scmp.eq.s32.totalorder %s29, 1
      %p125 = por %p123, %p124
      %p126 = scmp.ne.s32.totalorder %s115, %s116
      %p127 = scmp.eq.s32.totalorder %s29, 0
      %p128 = por %p126, %p127
      %p129 = scmp.ne.s32.totalorder %s115, %s116
      %p130 = scmp.eq.s32.totalorder %s30, 1
      %p131 = por %p129, %p130
      %p133 = scmp.ne.s32.totalorder %s116, %s132
      %p134 = scmp.eq.s32.totalorder %s30, 0
      %p135 = por %p133, %p134
      %s136 = ssub.s32 %s24, %s31
      %p137 = scmp.eq.s32.totalorder %s136, 0
      %s139 = sadd.s32 %s138, 1
      %s140 = scalar_select %p137, %s138, %s139
      %p143 = pneg %p137
      %p144 = scmp.eq.s32.totalorder %s24, 1
      %p145 = por %p143, %p144
      %p146 = scmp.ne.s32.totalorder %s138, %s141
      %p147 = scmp.eq.s32.totalorder %s24, 0
      %p148 = por %p146, %p147
      %p149 = scmp.ne.s32.totalorder %s138, %s141
      %p150 = scmp.eq.s32.totalorder %s29, 1
      %p151 = por %p149, %p150
      %p152 = scmp.ne.s32.totalorder %s141, %s142
      %p153 = scmp.eq.s32.totalorder %s29, 0
      %p154 = por %p152, %p153
      %p155 = scmp.ne.s32.totalorder %s141, %s142
      %p156 = scmp.eq.s32.totalorder %s30, 1
      %p157 = por %p155, %p156
      %p159 = scmp.ne.s32.totalorder %s142, %s158
      %p160 = scmp.eq.s32.totalorder %s30, 0
      %p161 = por %p159, %p160
      %s162 = ssub.s32 %s24, %s31
      %p163 = scmp.eq.s32.totalorder %s162, 0
      %s165 = sadd.s32 %s164, 1
      %s166 = scalar_select %p163, %s164, %s165
      %p169 = pneg %p163
      %p170 = scmp.eq.s32.totalorder %s24, 1
      %p171 = por %p169, %p170
      %p172 = scmp.ne.s32.totalorder %s164, %s167
      %p173 = scmp.eq.s32.totalorder %s24, 0
      %p174 = por %p172, %p173
      %p175 = scmp.ne.s32.totalorder %s164, %s167
      %p176 = scmp.eq.s32.totalorder %s29, 1
      %p177 = por %p175, %p176
      %p178 = scmp.ne.s32.totalorder %s167, %s168
      %p179 = scmp.eq.s32.totalorder %s29, 0
      %p180 = por %p178, %p179
      %p181 = scmp.ne.s32.totalorder %s167, %s168
      %p182 = scmp.eq.s32.totalorder %s30, 1
      %p183 = por %p181, %p182
      %p185 = scmp.ne.s32.totalorder %s168, %s184
      %p186 = scmp.eq.s32.totalorder %s30, 0
      %p187 = por %p185, %p186
      %s188 = ssub.s32 %s24, %s31
      %p189 = scmp.eq.s32.totalorder %s188, 0
      %s191 = sadd.s32 %s190, 1
      %s192 = scalar_select %p189, %s190, %s191
      %p195 = pneg %p189
      %p196 = scmp.eq.s32.totalorder %s24, 1
      %p197 = por %p195, %p196
      %p198 = scmp.ne.s32.totalorder %s190, %s193
      %p199 = scmp.eq.s32.totalorder %s24, 0
      %p200 = por %p198, %p199
      %p201 = scmp.ne.s32.totalorder %s190, %s193
      %p202 = scmp.eq.s32.totalorder %s29, 1
      %p203 = por %p201, %p202
      %p204 = scmp.ne.s32.totalorder %s193, %s194
      %p205 = scmp.eq.s32.totalorder %s29, 0
      %p206 = por %p204, %p205
      %p207 = scmp.ne.s32.totalorder %s193, %s194
      %p208 = scmp.eq.s32.totalorder %s30, 1
      %p209 = por %p207, %p208
      %p211 = scmp.ne.s32.totalorder %s194, %s210
      %p212 = scmp.eq.s32.totalorder %s30, 0
      %p213 = por %p211, %p212
      %p214 = scmp.le.s32.totalorder 1, %s24
      %p215 = scmp.lt.s32.totalorder %s24, 3
      %p216 = pnand %p214, %p215
      %p217 = pneg %p216
      // Predicated region
      $region9: #{tpu_custom_call.1} parent=5 // pred_check
        _
      $region10: #{tpu_custom_call.1} parent=5 // pred_check_branch
        %219 = sbr.rel (%p216) target = $region12
      $region11: #{tpu_custom_call.1} parent=5 // pred_region
        %s220 = ssub.s32 %s24, 1
      $region12: #{tpu_custom_call.1} parent=5 // pred_fallthru
        _
      %p221 = scmp.lt.s32.totalorder %s24, 2
      // Predicated region
      $region13: #{tpu_custom_call.1} parent=5 // pred_check
        %p222 = pneg %p221
      $region14: #{tpu_custom_call.1} parent=5 // pred_check_branch
        %224 = sbr.rel (%p222) target = $region16
      $region15: #{tpu_custom_call.1} parent=5 // pred_region
        // Predicated region
        $region17: #{tpu_custom_call.1} parent=15 // pred_check
          %p225 = pneg %p44
        $region18: #{tpu_custom_call.1} parent=15 // pred_check_branch
          %227 = sbr.rel (%p225) target = $region20
        $region19: #{tpu_custom_call.1} parent=15 // pred_region
          %s228 = sand.u32 %s34, 1
          %s229 = scalar_lea.sflag [#allocation3], %s228
          %s230 = sand.u32 %s34, 1
          %s231 = smul.addr %s230, 16
          %s232 = scalar_lea.vmem [#allocation2], %s231
          %s234 = ssub.s32 256, 256
          %235 = vsyncadd %s229, %s234
          %s236 = smul.addr %s24, 2
          %s237 = smul.addr %s236, 128
          %s238 = scalar_lea.hbm %s0, %s237
          %s239 = sshll.u32 %s232, 4
          %s240 = int_to_ptr.vmem [resolvable:$true] %s239
          %245 = dma.hbm_to_vmem [thread:$0]  %s238, 256, %s240, %s229, 128, 128, 8
        $region20: #{tpu_custom_call.1} parent=15 // pred_fallthru
          _
        // Predicated region
        $region21: #{tpu_custom_call.1} parent=15 // pred_check
          %p246 = pneg %p70
        $region22: #{tpu_custom_call.1} parent=15 // pred_check_branch
          %248 = sbr.rel (%p246) target = $region24
        $region23: #{tpu_custom_call.1} parent=15 // pred_region
          %s249 = sand.u32 %s24, 1
          %s250 = scalar_lea.sflag [#allocation6], %s249
          %s251 = sand.u32 %s60, 1
          %s252 = smul.addr %s251, 16
          %s253 = scalar_lea.vmem [#allocation5], %s252
          %s255 = ssub.s32 256, 256
          %256 = vsyncadd %s250, %s255
          %s257 = smul.addr %s24, 2
          %s258 = smul.addr %s257, 128
          %s259 = scalar_lea.hbm %s1, %s258
          %s260 = sshll.u32 %s253, 4
          %s261 = int_to_ptr.vmem [resolvable:$true] %s260
          %266 = dma.hbm_to_vmem [thread:$0]  %s259, 256, %s261, %s250, 128, 128, 8
        $region24: #{tpu_custom_call.1} parent=15 // pred_fallthru
          _
        // Predicated region
        $region25: #{tpu_custom_call.1} parent=15 // pred_check
          %p267 = pneg %p96
        $region26: #{tpu_custom_call.1} parent=15 // pred_check_branch
          %269 = sbr.rel (%p267) target = $region28
        $region27: #{tpu_custom_call.1} parent=15 // pred_region
          %s270 = sand.u32 %s24, 1
          %s271 = scalar_lea.sflag [#allocation6], %s270
          %s272 = sand.u32 %s86, 1
          %s273 = smul.addr %s272, 64
          %s274 = scalar_lea.vmem [#allocation7], %s273
          %s276 = ssub.s32 1024, 1024
          %277 = vsyncadd %s271, %s276
          %s278 = smul.addr %s24, 8
          %s279 = smul.addr %s278, 128
          %s280 = scalar_lea.hbm %s2, %s279
          %s281 = sshll.u32 %s274, 4
          %s282 = int_to_ptr.vmem [resolvable:$true] %s281
          %287 = dma.hbm_to_vmem [thread:$0]  %s280, 1024, %s282, %s271, 128, 128, 8
        $region28: #{tpu_custom_call.1} parent=15 // pred_fallthru
          _
        // Predicated region
        $region29: #{tpu_custom_call.1} parent=15 // pred_check
          %p288 = pneg %p122
        $region30: #{tpu_custom_call.1} parent=15 // pred_check_branch
          %290 = sbr.rel (%p288) target = $region32
        $region31: #{tpu_custom_call.1} parent=15 // pred_region
          %s291 = sand.u32 %s24, 1
          %s292 = scalar_lea.sflag [#allocation9], %s291
          %s293 = sand.u32 %s112, 1
          %s294 = smul.addr %s293, 64
          %s295 = scalar_lea.vmem [#allocation8], %s294
          %s297 = ssub.s32 1024, 1024
          %298 = vsyncadd %s292, %s297
          %s299 = smul.addr %s24, 8
          %s300 = smul.addr %s299, 128
          %s301 = scalar_lea.hbm %s3, %s300
          %s302 = sshll.u32 %s295, 4
          %s303 = int_to_ptr.vmem [resolvable:$true] %s302
          %308 = dma.hbm_to_vmem [thread:$0]  %s301, 1024, %s303, %s292, 128, 128, 8
        $region32: #{tpu_custom_call.1} parent=15 // pred_fallthru
          _
        // Predicated region
        $region33: #{tpu_custom_call.1} parent=15 // pred_check
          %p309 = pneg %p148
        $region34: #{tpu_custom_call.1} parent=15 // pred_check_branch
          %311 = sbr.rel (%p309) target = $region36
        $region35: #{tpu_custom_call.1} parent=15 // pred_region
          %s312 = sand.u32 %s24, 1
          %s313 = scalar_lea.sflag [#allocation9], %s312
          %s314 = sand.u32 %s138, 1
          %s315 = smul.addr %s314, 4
          %s316 = scalar_lea.vmem [#allocation10], %s315
          %s318 = ssub.s32 64, 64
          %319 = vsyncadd %s313, %s318
          %s320 = smul.addr %s24, 64
          %s321 = scalar_lea.hbm %s4, %s320
          %s323 = sshll.u32 %s316, 4
          %s324 = int_to_ptr.vmem [resolvable:$true] %s323
          %326 = dma.hbm_to_vmem [thread:$0]  %s321, 64, %s324, %s313
        $region36: #{tpu_custom_call.1} parent=15 // pred_fallthru
          _
        // Predicated region
        $region37: #{tpu_custom_call.1} parent=15 // pred_check
          %p327 = pneg %p174
        $region38: #{tpu_custom_call.1} parent=15 // pred_check_branch
          %329 = sbr.rel (%p327) target = $region40
        $region39: #{tpu_custom_call.1} parent=15 // pred_region
          %p330 = scmp.lt.s32.totalorder %s24, 1
          %s331 = scalar_select %p330, %s24, 1
          %s332 = scalar_lea.vmem %s5, %s331
        $region40: #{tpu_custom_call.1} parent=15 // pred_fallthru
          _
      $region16: #{tpu_custom_call.1} parent=5 // pred_fallthru
        _
      %p333 = scmp.le.s32.totalorder 1, %s24
      %p334 = scmp.lt.s32.totalorder %s24, 3
      %p335 = pnand %p333, %p334
      %p336 = pneg %p335
      // Predicated region
      $region41: #{tpu_custom_call.1} parent=5 // pred_check
        _
      $region42: #{tpu_custom_call.1} parent=5 // pred_check_branch
        %338 = sbr.rel (%p335) target = $region44
      $region43: #{tpu_custom_call.1} parent=5 // pred_region
        %s339 = ssub.s32 %s24, 1
        %s340 = sand.u32 %s37, 1
        %s341 = scalar_lea.sflag [#allocation3], %s340
        %s342 = sand.u32 %s37, 1
        %s343 = smul.addr %s342, 16
        %s344 = scalar_lea.vmem [#allocation2], %s343
        // Predicated region
        $region45: #{tpu_custom_call.1} parent=43 // pred_check
          %p345 = pneg %p50
        $region46: #{tpu_custom_call.1} parent=43 // pred_check_branch
          %347 = sbr.rel (%p345) target = $region48
        $region47: #{tpu_custom_call.1} parent=43 // pred_region
          %348 = dma.done %s341, 256
        $region48: #{tpu_custom_call.1} parent=43 // pred_fallthru
          _
        %s349 = sand.u32 %s29, 1
        %s350 = scalar_lea.sflag [#allocation6], %s349
        %s351 = sand.u32 %s63, 1
        %s352 = smul.addr %s351, 16
        %s353 = scalar_lea.vmem [#allocation5], %s352
        // Predicated region
        $region49: #{tpu_custom_call.1} parent=43 // pred_check
          %p354 = pneg %p76
        $region50: #{tpu_custom_call.1} parent=43 // pred_check_branch
          %356 = sbr.rel (%p354) target = $region52
        $region51: #{tpu_custom_call.1} parent=43 // pred_region
          %357 = dma.done %s350, 256
        $region52: #{tpu_custom_call.1} parent=43 // pred_fallthru
          _
        %s358 = sand.u32 %s29, 1
        %s359 = scalar_lea.sflag [#allocation6], %s358
        %s360 = sand.u32 %s89, 1
        %s361 = smul.addr %s360, 64
        %s362 = scalar_lea.vmem [#allocation7], %s361
        // Predicated region
        $region53: #{tpu_custom_call.1} parent=43 // pred_check
          %p363 = pneg %p102
        $region54: #{tpu_custom_call.1} parent=43 // pred_check_branch
          %365 = sbr.rel (%p363) target = $region56
        $region55: #{tpu_custom_call.1} parent=43 // pred_region
          %366 = dma.done %s359, 1024
        $region56: #{tpu_custom_call.1} parent=43 // pred_fallthru
          _
        %s367 = sand.u32 %s29, 1
        %s368 = scalar_lea.sflag [#allocation9], %s367
        %s369 = sand.u32 %s115, 1
        %s370 = smul.addr %s369, 64
        %s371 = scalar_lea.vmem [#allocation8], %s370
        // Predicated region
        $region57: #{tpu_custom_call.1} parent=43 // pred_check
          %p372 = pneg %p128
        $region58: #{tpu_custom_call.1} parent=43 // pred_check_branch
          %374 = sbr.rel (%p372) target = $region60
        $region59: #{tpu_custom_call.1} parent=43 // pred_region
          %375 = dma.done %s368, 1024
        $region60: #{tpu_custom_call.1} parent=43 // pred_fallthru
          _
        %s376 = sand.u32 %s29, 1
        %s377 = scalar_lea.sflag [#allocation9], %s376
        %s378 = sand.u32 %s141, 1
        %s379 = smul.addr %s378, 4
        %s380 = scalar_lea.vmem [#allocation10], %s379
        // Predicated region
        $region61: #{tpu_custom_call.1} parent=43 // pred_check
          %p381 = pneg %p154
        $region62: #{tpu_custom_call.1} parent=43 // pred_check_branch
          %383 = sbr.rel (%p381) target = $region64
        $region63: #{tpu_custom_call.1} parent=43 // pred_region
          %384 = dma.done %s377, 64
        $region64: #{tpu_custom_call.1} parent=43 // pred_fallthru
          _
        %s385 = sand.u32 %s37, 1
        %s386 = scalar_lea.sflag [#allocation3], %s385
        %s387 = sand.u32 %s37, 1
        %s388 = smul.addr %s387, 16
        %s389 = scalar_lea.vmem [#allocation2], %s388
        %p390 = pneg %p50
        %p391 = pneg %p47
        %s392 = sand.u32 %s29, 1
        %s393 = scalar_lea.sflag [#allocation6], %s392
        %s394 = sand.u32 %s63, 1
        %s395 = smul.addr %s394, 16
        %s396 = scalar_lea.vmem [#allocation5], %s395
        %p397 = pneg %p76
        %p398 = pneg %p73
        %s399 = sand.u32 %s29, 1
        %s400 = scalar_lea.sflag [#allocation6], %s399
        %s401 = sand.u32 %s89, 1
        %s402 = smul.addr %s401, 64
        %s403 = scalar_lea.vmem [#allocation7], %s402
        %p404 = pneg %p102
        %p405 = pneg %p99
        %s406 = sand.u32 %s29, 1
        %s407 = scalar_lea.sflag [#allocation9], %s406
        %s408 = sand.u32 %s115, 1
        %s409 = smul.addr %s408, 64
        %s410 = scalar_lea.vmem [#allocation8], %s409
        %p411 = pneg %p128
        %p412 = pneg %p125
        %s413 = sand.u32 %s29, 1
        %s414 = scalar_lea.sflag [#allocation9], %s413
        %s415 = sand.u32 %s141, 1
        %s416 = smul.addr %s415, 4
        %s417 = scalar_lea.vmem [#allocation10], %s416
        %p418 = pneg %p154
        %p419 = pneg %p151
        %p420 = scmp.lt.s32.totalorder %s29, 1
        %s421 = scalar_select %p420, %s29, 1
        %s422 = scalar_lea.vmem %s5, %s421
        %p423 = pneg %p180
        %p424 = pneg %p177
        %p425 = pneg %p206
        %p426 = pneg %p203
        %s427 = sand.u32 %s193, 1
        %s428 = scalar_lea.sflag [#allocation4], %s427
        %s429 = sand.u32 %s193, 1
        %s430 = smul.addr %s429, 4
        %s431 = scalar_lea.vmem [#allocation11], %s430
        %p432 = scmp.lt.s32.totalorder %s29, 1
        %s433 = scalar_select %p432, %s29, 1
        %s434 = scalar_lea.vmem %s5, %s433
        %v435 = vld [vmem:[%s344] sm:$0xff]
        %v436 = vld [vmem:[%s344 + $0x8] sm:$0xff]
        %v437 = vld [vmem:[%s353] sm:$0xff]
        %v438 = vld [vmem:[%s353 + $0x8] sm:$0xff]
        %v439 = vmul.f32 %v435, %v437
        %v440 = vmul.f32 %v436, %v438
        %vm441 = vcmask 261120
        %v442 = vsel %vm441, %v439, 0.0
        %443 = vadd.xlane.f32.xlu0 %v442
        %v444 = vpop.xlane.xlu0 %443
        %v445 = vsel %vm441, %v440, 0.0
        %446 = vadd.xlane.f32.xlu0 %v445
        %v447 = vpop.xlane.xlu0 %446
        %v448 = vld [vmem:[%s362] sm:$0xff]
        %v449 = vld [vmem:[%s362 + $0x8] sm:$0xff]
        %v450 = vld [vmem:[%s371] sm:$0xff]
        %v451 = vld [vmem:[%s371 + $0x8] sm:$0xff]
        %v452 = vmul.f32 %v448, %v450
        %v453 = vmul.f32 %v449, %v451
        %v454 = vsel %vm441, %v452, 0.0
        %455 = vadd.xlane.f32.xlu0 %v454
        %v456 = vpop.xlane.xlu0 %455
        %v457 = vsel %vm441, %v453, 0.0
        %458 = vadd.xlane.f32.xlu0 %v457
        %v459 = vpop.xlane.xlu0 %458
        %v460 = vld [vmem:[%s380] sm:$0x1]
        %v462 = vlaneseq
        %v463 = vshrl.u32 %v462, 7
        %v464 = vsub.s32 0, %v463
        %v465 = vrot.slane %v460, %v464
        %467 = vbcast.lane.b32.xlu0 %v465, 256
        %v468 = vpop.permute.xlu0 %467
        %s470 = sor.u32 256, 8
        %471 = vbcast.lane.b32.xlu0 %v465, %s470
        %v472 = vpop.permute.xlu0 %471
        %v475 = vmul.f32 %v456, %v468
        %v476 = vmul.f32 %v459, %v472
        %v477 = vmax.f32 %v444, %v475
        %v478 = vmax.f32 %v447, %v476
        %v479 = vadd.f32 %v475, 0.0
        %v480 = vadd.f32 %v476, 0.0
        %s481 = scalar_lea.vmem %s362, 16 [#allocation7]
        %v482 = vld [vmem:[%s481] sm:$0xff]
        %v483 = vld [vmem:[%s481 + $0x8] sm:$0xff]
        %s484 = scalar_lea.vmem %s371, 16 [#allocation8]
        %v485 = vld [vmem:[%s484] sm:$0xff]
        %v486 = vld [vmem:[%s484 + $0x8] sm:$0xff]
        %v487 = vmul.f32 %v482, %v485
        %v488 = vmul.f32 %v483, %v486
        %v489 = vsel %vm441, %v487, 0.0
        %490 = vadd.xlane.f32.xlu0 %v489
        %v491 = vpop.xlane.xlu0 %490
        %v492 = vsel %vm441, %v488, 0.0
        %493 = vadd.xlane.f32.xlu0 %v492
        %v494 = vpop.xlane.xlu0 %493
        %v495 = vld [vmem:[%s380 + $0x1] sm:$0x1]
        %v497 = vlaneseq
        %v498 = vshrl.u32 %v497, 7
        %v499 = vsub.s32 0, %v498
        %v500 = vrot.slane %v495, %v499
        %502 = vbcast.lane.b32.xlu0 %v500, 256
        %v503 = vpop.permute.xlu0 %502
        %s505 = sor.u32 256, 8
        %506 = vbcast.lane.b32.xlu0 %v500, %s505
        %v507 = vpop.permute.xlu0 %506
        %v510 = vmul.f32 %v491, %v503
        %v511 = vmul.f32 %v494, %v507
        %v512 = vmax.f32 %v477, %v510
        %v513 = vmax.f32 %v478, %v511
        %v514 = vadd.f32 %v479, %v510
        %v515 = vadd.f32 %v480, %v511
        %s516 = scalar_lea.vmem %s362, 32 [#allocation7]
        %v517 = vld [vmem:[%s516] sm:$0xff]
        %v518 = vld [vmem:[%s516 + $0x8] sm:$0xff]
        %s519 = scalar_lea.vmem %s371, 32 [#allocation8]
        %v520 = vld [vmem:[%s519] sm:$0xff]
        %v521 = vld [vmem:[%s519 + $0x8] sm:$0xff]
        %v522 = vmul.f32 %v517, %v520
        %v523 = vmul.f32 %v518, %v521
        %v524 = vsel %vm441, %v522, 0.0
        %525 = vadd.xlane.f32.xlu0 %v524
        %v526 = vpop.xlane.xlu0 %525
        %v527 = vsel %vm441, %v523, 0.0
        %528 = vadd.xlane.f32.xlu0 %v527
        %v529 = vpop.xlane.xlu0 %528
        %v530 = vld [vmem:[%s380 + $0x2] sm:$0x1]
        %v532 = vlaneseq
        %v533 = vshrl.u32 %v532, 7
        %v534 = vsub.s32 0, %v533
        %v535 = vrot.slane %v530, %v534
        %537 = vbcast.lane.b32.xlu0 %v535, 256
        %v538 = vpop.permute.xlu0 %537
        %s540 = sor.u32 256, 8
        %541 = vbcast.lane.b32.xlu0 %v535, %s540
        %v542 = vpop.permute.xlu0 %541
        %v545 = vmul.f32 %v526, %v538
        %v546 = vmul.f32 %v529, %v542
        %v547 = vmax.f32 %v512, %v545
        %v548 = vmax.f32 %v513, %v546
        %v549 = vadd.f32 %v514, %v545
        %v550 = vadd.f32 %v515, %v546
        %s551 = scalar_lea.vmem %s362, 48 [#allocation7]
        %v552 = vld [vmem:[%s551] sm:$0xff]
        %v553 = vld [vmem:[%s551 + $0x8] sm:$0xff]
        %s554 = scalar_lea.vmem %s371, 48 [#allocation8]
        %v555 = vld [vmem:[%s554] sm:$0xff]
        %v556 = vld [vmem:[%s554 + $0x8] sm:$0xff]
        %v557 = vmul.f32 %v552, %v555
        %v558 = vmul.f32 %v553, %v556
        %v559 = vsel %vm441, %v557, 0.0
        %560 = vadd.xlane.f32.xlu0 %v559
        %v561 = vpop.xlane.xlu0 %560
        %v562 = vsel %vm441, %v558, 0.0
        %563 = vadd.xlane.f32.xlu0 %v562
        %v564 = vpop.xlane.xlu0 %563
        %v565 = vld [vmem:[%s380 + $0x3] sm:$0x1]
        %v567 = vlaneseq
        %v568 = vshrl.u32 %v567, 7
        %v569 = vsub.s32 0, %v568
        %v570 = vrot.slane %v565, %v569
        %572 = vbcast.lane.b32.xlu0 %v570, 256
        %v573 = vpop.permute.xlu0 %572
        %s575 = sor.u32 256, 8
        %576 = vbcast.lane.b32.xlu0 %v570, %s575
        %v577 = vpop.permute.xlu0 %576
        %v580 = vmul.f32 %v561, %v573
        %v581 = vmul.f32 %v564, %v577
        %v582 = vmax.f32 %v547, %v580
        %v583 = vmax.f32 %v548, %v581
        %v584 = vadd.f32 %v549, %v580
        %v585 = vadd.f32 %v550, %v581
        %v586 = vsub.f32 %v444, %v582
        %v587 = vsub.f32 %v447, %v583
        %v588 = vmul.f32 %v586, 1.442695
        %v589 = vpow.pop %v588
        %v590 = vmul.f32 %v587, 1.442695
        %v591 = vpow.pop %v590
        %v592 = vsub.f32 %v475, %v582
        %v593 = vsub.f32 %v476, %v583
        %v594 = vmul.f32 %v592, 1.442695
        %v595 = vpow.pop %v594
        %v596 = vmul.f32 %v593, 1.442695
        %v597 = vpow.pop %v596
        %v598 = vadd.f32 %v589, %v595
        %v599 = vadd.f32 %v591, %v597
        %v600 = vsub.f32 %v510, %v582
        %v601 = vsub.f32 %v511, %v583
        %v602 = vmul.f32 %v600, 1.442695
        %v603 = vpow.pop %v602
        %v604 = vmul.f32 %v601, 1.442695
        %v605 = vpow.pop %v604
        %v606 = vadd.f32 %v598, %v603
        %v607 = vadd.f32 %v599, %v605
        %v608 = vsub.f32 %v545, %v582
        %v609 = vsub.f32 %v546, %v583
        %v610 = vmul.f32 %v608, 1.442695
        %v611 = vpow.pop %v610
        %v612 = vmul.f32 %v609, 1.442695
        %v613 = vpow.pop %v612
        %v614 = vadd.f32 %v606, %v611
        %v615 = vadd.f32 %v607, %v613
        %v616 = vsub.f32 %v580, %v582
        %v617 = vsub.f32 %v581, %v583
        %v618 = vmul.f32 %v616, 1.442695
        %v619 = vpow.pop %v618
        %v620 = vmul.f32 %v617, 1.442695
        %v621 = vpow.pop %v620
        %v622 = vadd.f32 %v614, %v619
        %v623 = vadd.f32 %v615, %v621
        %v624 = vlog2.pop %v622
        %v625 = vmul.f32 %v624, 0.6931472
        %v626 = vlog2.pop %v623
        %v627 = vmul.f32 %v626, 0.6931472
        %v628 = vadd.f32 %v625, %v582
        %v629 = vadd.f32 %v627, %v583
        %v630 = vmul.f32 %v628, 1.0333333
        %v631 = vmul.f32 %v629, 1.0333333
        %v632 = vmul.f32 %v444, 0.9
        %v633 = vmul.f32 %v447, 0.9
        %v634 = vsub.f32 %v630, %v632
        %v635 = vsub.f32 %v631, %v633
        %v636 = vmul.f32 %v584, 0.033333335
        %v637 = vmul.f32 %v585, 0.033333335
        %v638 = vsub.f32 %v634, %v636
        %v639 = vsub.f32 %v635, %v637
        %v640 = vmax.f32 %v444, -1.0
        %v641 = vmax.f32 %v447, -1.0
        %v642 = vmin.f32 %v640, 1.0
        %v643 = vmin.f32 %v641, 1.0
        %v644 = vsub.f32 1.0, %v642
        %v645 = vsub.f32 1.0, %v643
        %v646 = vsub.f32 0.0, %v444
        %v647 = vsub.f32 0.0, %v447
        %v648 = vmax.f32 %v646, 0.0
        %v649 = vmax.f32 %v647, 0.0
        %v650 = vld [vmem:[%s434] sm:$0x1]
        %v652 = vlaneseq
        %v653 = vshrl.u32 %v652, 7
        %v654 = vsub.s32 0, %v653
        %v655 = vrot.slane %v650, %v654
        %657 = vbcast.lane.b32.xlu0 %v655, 256
        %v658 = vpop.permute.xlu0 %657
        %s660 = sor.u32 256, 8
        %661 = vbcast.lane.b32.xlu0 %v655, %s660
        %v662 = vpop.permute.xlu0 %661
        %v665 = vmul.f32 %v638, %v658
        %v666 = vmul.f32 %v639, %v662
        %v667 = vadd.f32 %v665, 0.0
        %v668 = vadd.f32 %v666, 0.0
        %v669 = vmul.f32 %v644, %v658
        %v670 = vmul.f32 %v645, %v662
        %v671 = vadd.f32 %v669, 0.0
        %v672 = vadd.f32 %v670, 0.0
        %v673 = vmul.f32 %v648, %v658
        %v674 = vmul.f32 %v649, %v662
        %v675 = vadd.f32 %v673, 0.0
        %v676 = vadd.f32 %v674, 0.0
        %v677 = vadd.f32 %v650, 0.0
        %680 = vset.pattern.permute.xlu0 0
        %681 = vperm.xlu0 %680, %v667
        %v682 = vpop.permute.xlu0 %681
        %683 = vset.pattern.permute.xlu0 0
        %684 = vperm.xlu0 %683, %v668
        %v685 = vpop.permute.xlu0 %684
        %v686 = vlaneseq
        %v687 = vand.u32 %v686, 127
        %v688 = vlaneseq
        %v689 = vshrl.u32 %v688, 7
        %v690 = vsub.s32 %v687, %v689
        %v691 = vrot.slane %v682, %v690
        %v692 = vadd.s32 %v687, 4294967288
        %v693 = vlaneseq
        %v694 = vshrl.u32 %v693, 7
        %v695 = vsub.s32 %v692, %v694
        %v696 = vrot.slane %v685, %v695
        %vm697 = vcmask 130112
        %v698 = vsel %vm697, %v696, %v691
        %702 = vset.pattern.permute.xlu0 0
        %703 = vperm.xlu0 %702, %v671
        %v704 = vpop.permute.xlu0 %703
        %705 = vset.pattern.permute.xlu0 0
        %706 = vperm.xlu0 %705, %v672
        %v707 = vpop.permute.xlu0 %706
        %v708 = vlaneseq
        %v709 = vshrl.u32 %v708, 7
        %v710 = vsub.s32 %v687, %v709
        %v711 = vrot.slane %v704, %v710
        %v712 = vlaneseq
        %v713 = vshrl.u32 %v712, 7
        %v714 = vsub.s32 %v692, %v713
        %v715 = vrot.slane %v707, %v714
        %v716 = vsel %vm697, %v715, %v711
        %720 = vset.pattern.permute.xlu0 0
        %721 = vperm.xlu0 %720, %v675
        %v722 = vpop.permute.xlu0 %721
        %723 = vset.pattern.permute.xlu0 0
        %724 = vperm.xlu0 %723, %v676
        %v725 = vpop.permute.xlu0 %724
        %v726 = vlaneseq
        %v727 = vshrl.u32 %v726, 7
        %v728 = vsub.s32 %v687, %v727
        %v729 = vrot.slane %v722, %v728
        %v730 = vlaneseq
        %v731 = vshrl.u32 %v730, 7
        %v732 = vsub.s32 %v692, %v731
        %v733 = vrot.slane %v725, %v732
        %v734 = vsel %vm697, %v733, %v729
        %v737 = vlaneseq
        %v738 = vshrl.u32 %v737, 7
        %v739 = vsub.s32 0, %v738
        %v740 = vrot.slane %v677, %v739
        %vm742 = vcmask 1040384
        %v743 = vsel %vm742, %v698, %v716
        %vm744 = vcmask 1041408
        %v745 = vsel %vm744, %v743, %v734
        %vm746 = vcmask 1042432
        %v747 = vsel %vm746, %v745, %v740
        %vm748 = vcmask 125952
        %749 = vst.msk [vmem:[%s431] sm:$0xf] %vm748, %v747
        %s750 = sand.u32 %s193, 1
        %s751 = scalar_lea.sflag [#allocation4], %s750
        %s752 = sand.u32 %s193, 1
        %s753 = smul.addr %s752, 4
        %s754 = scalar_lea.vmem [#allocation11], %s753
        // Predicated region
        $region65: #{tpu_custom_call.1} parent=43 // pred_check
          %p755 = pneg %p203
        $region66: #{tpu_custom_call.1} parent=43 // pred_check_branch
          %757 = sbr.rel (%p755) target = $region68
        $region67: #{tpu_custom_call.1} parent=43 // pred_region
          %s759 = ssub.s32 64, 64
          %760 = vsyncadd %s751, %s759
          %s761 = smul.addr %s29, 64
          %s762 = scalar_lea.hbm %s6, %s761
          %s764 = sshll.u32 %s754, 4
          %s765 = int_to_ptr.vmem [resolvable:$true] %s764
          %767 = dma.vmem_to_hbm [thread:$0]  %s765, 64, %s762, %s751
        $region68: #{tpu_custom_call.1} parent=43 // pred_fallthru
          _
      $region44: #{tpu_custom_call.1} parent=5 // pred_fallthru
        _
      %p768 = scmp.le.s32.totalorder 2, %s24
      // Predicated region
      $region69: #{tpu_custom_call.1} parent=5 // pred_check
        %p769 = pneg %p768
      $region70: #{tpu_custom_call.1} parent=5 // pred_check_branch
        %771 = sbr.rel (%p769) target = $region72
      $region71: #{tpu_custom_call.1} parent=5 // pred_region
        %s772 = ssub.s32 %s24, 2
        // Predicated region
        $region73: #{tpu_custom_call.1} parent=71 // pred_check
          %p773 = pneg %p209
        $region74: #{tpu_custom_call.1} parent=71 // pred_check_branch
          %775 = sbr.rel (%p773) target = $region76
        $region75: #{tpu_custom_call.1} parent=71 // pred_region
          %s776 = sand.u32 %s194, 1
          %s777 = scalar_lea.sflag [#allocation4], %s776
          %s778 = sand.u32 %s194, 1
          %s779 = smul.addr %s778, 4
          %s780 = scalar_lea.vmem [#allocation11], %s779
          %781 = dma.done %s777, 64
        $region76: #{tpu_custom_call.1} parent=71 // pred_fallthru
          _
      $region72: #{tpu_custom_call.1} parent=5 // pred_fallthru
        _
    $region6: #{tpu_custom_call.1} parent=1 // loop_footer
      %s28 = sadd.s32 1, %s24
    $region7: #{tpu_custom_call.1} parent=1 // loop_footer_branch
      %23 = sbr.rel target = $region3
    $region8: #{tpu_custom_call.1} parent=1 // loop_exit
      _
    %782 = vsyncpa [#allocation3], 1
    %s783 = scalar_lea.sflag [#allocation3], 1
    %784 = vsyncpa %s783, 1
    %785 = vsyncpa [#allocation6], 1
    %s786 = scalar_lea.sflag [#allocation6], 1
    %787 = vsyncpa %s786, 1
    %788 = vsyncpa [#allocation9], 1
    %s789 = scalar_lea.sflag [#allocation9], 1
    %790 = vsyncpa %s789, 1
    %791 = vsyncpa [#allocation4], 1
    %s792 = scalar_lea.sflag [#allocation4], 1
    %793 = vsyncpa %s792, 1

</llo_original>
